<compile_context>
chip_gen: v6e
topology: v6e:2x2x1
jax: 0.10.0
libtpu: 0.0.40
codegen_flags: <defaults>
</compile_context>

<pallas_src>
import jax
import jax.numpy as jnp
from jax.experimental import pallas as pl
from jax.experimental.pallas import tpu as pltpu


def _round_up(x, m):
    return (x + m - 1) // m * m


def critic_kernel(x_ref, w1_ref, b1_ref, w2_ref, b2_ref, w3_ref, b3_ref, out_ref):
    # x_ref: (TB, OBS) bf16 ; w1: (OBS, HID) bf16 ; w2: (HID, HID) bf16
    # b1, b2: (1, HID) f32  ; w3: (1, HID) f32    ; b3: (1,) f32 in SMEM
    x = x_ref[...]

    # Layer 1: bf16 MXU inputs, f32 accumulate; bias + ReLU in f32.
    h1 = jnp.dot(x, w1_ref[...], preferred_element_type=jnp.float32) + b1_ref[...]
    h1 = jnp.maximum(h1, 0.0)

    # Layer 2.
    h2 = jnp.dot(h1.astype(jnp.bfloat16), w2_ref[...],
                 preferred_element_type=jnp.float32) + b2_ref[...]
    h2 = jnp.maximum(h2, 0.0)

    # Layer 3 (out_features == 1): VPU multiply + lane reduction instead of an
    # MXU matmul with a single output column.
    out = jnp.sum(h2 * w3_ref[...], axis=-1, keepdims=True) + b3_ref[0]
    out_ref[...] = out.astype(out_ref.dtype)


def critic_forward(x, params, *, block_b=512):
    """x: (B, obs_size) float32.  Returns (B, 1) float32."""
    w1, b1, w2, b2, w3_row, b3 = params
    B, obs = x.shape
    hid = w1.shape[1]

    # Batch tile: multiple of 8 sublanes, capped so the double-buffered x/out
    # tiles + resident weights comfortably fit v7x's 64 MiB VMEM.
    tb = min(block_b, _round_up(B, 8))
    b_pad = _round_up(B, tb)

    xb = x.astype(jnp.bfloat16)
    if b_pad != B:
        xb = jnp.pad(xb, ((0, b_pad - B), (0, 0)))

    grid = (b_pad // tb,)

    out = pl.pallas_call(
        critic_kernel,
        out_shape=jax.ShapeDtypeStruct((b_pad, 1), jnp.float32),
        grid=grid,
        in_specs=[
            pl.BlockSpec((tb, obs), lambda i: (i, 0)),          # x: streamed over batch
            pl.BlockSpec((obs, hid), lambda i: (0, 0)),         # w1: VMEM-resident
            pl.BlockSpec((1, hid), lambda i: (0, 0)),           # b1
            pl.BlockSpec((hid, hid), lambda i: (0, 0)),         # w2
            pl.BlockSpec((1, hid), lambda i: (0, 0)),           # b2
            pl.BlockSpec((1, hid), lambda i: (0, 0)),           # w3 row
            pl.BlockSpec(memory_space=pltpu.MemorySpace.SMEM),  # b3 scalar
        ],
        out_specs=pl.BlockSpec((tb, 1), lambda i: (i, 0)),
        compiler_params=pltpu.CompilerParams(
            dimension_semantics=("parallel",),  # megacore-shard the batch axis (v7x)
        ),
    )(xb, w1.astype(jnp.bfloat16), b1, w2.astype(jnp.bfloat16), b2, w3_row, b3)

    return out[:B]


def init_params(key, obs_size, hidden_size):
    """Deterministic synthetic init (PyTorch-Linear-like uniform bounds)."""
    ks = jax.random.split(key, 6)

    def lin(kw, kb, fan_in, fan_out):
        bound = 1.0 / jnp.sqrt(jnp.float32(fan_in))
        w = jax.random.uniform(kw, (fan_in, fan_out), jnp.float32, -bound, bound)
        b = jax.random.uniform(kb, (1, fan_out), jnp.float32, -bound, bound)
        return w, b

    w1, b1 = lin(ks[0], ks[1], obs_size, hidden_size)
    w2, b2 = lin(ks[2], ks[3], hidden_size, hidden_size)
    w3, b3 = lin(ks[4], ks[5], hidden_size, 1)
    w3_row = w3.T                    # (1, hidden): PyTorch layout of the last layer
    b3_scalar = b3.reshape((1,))     # (1,) scalar bias, kept in SMEM
    return (w1, b1, w2, b2, w3_row, b3_scalar)


def reference_forward(x, params):
    """Plain-JAX reference matching the kernel's bf16-MXU / f32-elementwise mix."""
    w1, b1, w2, b2, w3_row, b3 = params
    h1 = jnp.dot(x.astype(jnp.bfloat16), w1.astype(jnp.bfloat16),
                 preferred_element_type=jnp.float32) + b1
    h1 = jnp.maximum(h1, 0.0)
    h2 = jnp.dot(h1.astype(jnp.bfloat16), w2.astype(jnp.bfloat16),
                 preferred_element_type=jnp.float32) + b2
    h2 = jnp.maximum(h2, 0.0)
    return jnp.sum(h2 * w3_row, axis=-1, keepdims=True) + b3[0]


def reference_forward_f32(x, params):
    """Pure f32 reference (loose sanity check against the bf16 path)."""
    w1, b1, w2, b2, w3_row, b3 = params
    h1 = jnp.maximum(x @ w1 + b1, 0.0)
    h2 = jnp.maximum(h1 @ w2 + b2, 0.0)
    return jnp.sum(h2 * w3_row, axis=-1, keepdims=True) + b3[0]


if __name__ == "__main__":
    OBS, HID = 32, 32
    key = jax.random.PRNGKey(0)
    k_x, k_x2, k_p = jax.random.split(key, 3)
    params = init_params(k_p, OBS, HID)

    # Small batch (single tile).
    x = jax.random.normal(k_x, (8, OBS), jnp.float32)
    out = jax.block_until_ready(critic_forward(x, params))
    ref = reference_forward(x, params)
    assert out.shape == (8, 1)
    assert jnp.allclose(out, ref, atol=1e-3, rtol=1e-3)
    assert jnp.allclose(out, reference_forward_f32(x, params), atol=5e-2, rtol=5e-2)

    # Ragged batch + multiple grid steps (exercises padding + pipelined tiling).
    x2 = jax.random.normal(k_x2, (37, OBS), jnp.float32)
    out2 = jax.block_until_ready(critic_forward(x2, params, block_b=16))
    ref2 = reference_forward(x2, params)
    assert out2.shape == (37, 1)
    assert jnp.allclose(out2, ref2, atol=1e-3, rtol=1e-3)

    print("KERNEL_OK")
</pallas_src>

<mosaic_0001>
module attributes {stable_mosaic.version = 11 : i64} {
  func.func @critic_kernel(%arg0: i32, %arg1: memref<8x32xbf16, #tpu.memory_space<vmem>>, %arg2: memref<32x32xbf16, #tpu.memory_space<vmem>>, %arg3: memref<1x32xf32, #tpu.memory_space<vmem>>, %arg4: memref<32x32xbf16, #tpu.memory_space<vmem>>, %arg5: memref<1x32xf32, #tpu.memory_space<vmem>>, %arg6: memref<1x32xf32, #tpu.memory_space<vmem>>, %arg7: memref<1xf32, #tpu.memory_space<smem>>, %arg8: memref<8x1xf32, #tpu.memory_space<vmem>>) attributes {dimension_semantics = [#tpu.dimension_semantics<parallel>], iteration_bounds = array<i64: 1>, scalar_prefetch = 0 : i64, scratch_operands = 0 : i64, tpu.core_type = #tpu.core_type<tc>, window_params = [{transform_indices = @transform_0, window_bounds = array<i64: 8, 32>}, {pipeline_mode = #tpu.pipeline_mode<synchronous>, transform_indices = @transform_1, window_bounds = array<i64: 32, 32>}, {pipeline_mode = #tpu.pipeline_mode<synchronous>, transform_indices = @transform_2, window_bounds = array<i64: 1, 32>}, {pipeline_mode = #tpu.pipeline_mode<synchronous>, transform_indices = @transform_3, window_bounds = array<i64: 32, 32>}, {pipeline_mode = #tpu.pipeline_mode<synchronous>, transform_indices = @transform_4, window_bounds = array<i64: 1, 32>}, {pipeline_mode = #tpu.pipeline_mode<synchronous>, transform_indices = @transform_5, window_bounds = array<i64: 1, 32>}, {transform_indices = @transform_6, window_bounds = array<i64: 1>}, {transform_indices = @transform_7, window_bounds = array<i64: 8, 1>}]} {
    %c0 = arith.constant 0 : index
    %c0_0 = arith.constant 0 : index
    %0 = vector.load %arg1[%c0, %c0_0] : memref<8x32xbf16, #tpu.memory_space<vmem>>, vector<8x32xbf16>
    %c0_1 = arith.constant 0 : index
    %c0_2 = arith.constant 0 : index
    %1 = vector.load %arg2[%c0_1, %c0_2] : memref<32x32xbf16, #tpu.memory_space<vmem>>, vector<32x32xbf16>
    %cst = arith.constant dense<0.000000e+00> : vector<8x32xf32>
    %2 = tpu.matmul %0, %1, %cst {dimension_numbers = #tpu.dot_dimension_numbers<[1], [0], [0], [1], [0, 0, 1, 1], [], []>} : vector<8x32xbf16>, vector<32x32xbf16>, vector<8x32xf32> -> vector<8x32xf32>
    %c0_3 = arith.constant 0 : index
    %c0_4 = arith.constant 0 : index
    %3 = vector.load %arg3[%c0_3, %c0_4] : memref<1x32xf32, #tpu.memory_space<vmem>>, vector<1x32xf32>
    %4 = vector.broadcast %3 : vector<1x32xf32> to vector<8x32xf32>
    %5 = arith.addf %2, %4 : vector<8x32xf32>
    %cst_5 = arith.constant 0.000000e+00 : f32
    %6 = vector.broadcast %cst_5 : f32 to vector<8x32xf32>
    %7 = arith.maximumf %5, %6 : vector<8x32xf32>
    %8 = arith.truncf %7 : vector<8x32xf32> to vector<8x32xbf16>
    %c0_6 = arith.constant 0 : index
    %c0_7 = arith.constant 0 : index
    %9 = vector.load %arg4[%c0_6, %c0_7] : memref<32x32xbf16, #tpu.memory_space<vmem>>, vector<32x32xbf16>
    %cst_8 = arith.constant dense<0.000000e+00> : vector<8x32xf32>
    %10 = tpu.matmul %8, %9, %cst_8 {dimension_numbers = #tpu.dot_dimension_numbers<[1], [0], [0], [1], [0, 0, 1, 1], [], []>} : vector<8x32xbf16>, vector<32x32xbf16>, vector<8x32xf32> -> vector<8x32xf32>
    %c0_9 = arith.constant 0 : index
    %c0_10 = arith.constant 0 : index
    %11 = vector.load %arg5[%c0_9, %c0_10] : memref<1x32xf32, #tpu.memory_space<vmem>>, vector<1x32xf32>
    %12 = vector.broadcast %11 : vector<1x32xf32> to vector<8x32xf32>
    %13 = arith.addf %10, %12 : vector<8x32xf32>
    %cst_11 = arith.constant 0.000000e+00 : f32
    %14 = vector.broadcast %cst_11 : f32 to vector<8x32xf32>
    %15 = arith.maximumf %13, %14 : vector<8x32xf32>
    %c0_12 = arith.constant 0 : index
    %c0_13 = arith.constant 0 : index
    %16 = vector.load %arg6[%c0_12, %c0_13] : memref<1x32xf32, #tpu.memory_space<vmem>>, vector<1x32xf32>
    %17 = vector.broadcast %16 : vector<1x32xf32> to vector<8x32xf32>
    %18 = arith.mulf %15, %17 : vector<8x32xf32>
    %cst_14 = arith.constant dense<0.000000e+00> : vector<8xf32>
    %19 = vector.multi_reduction <add>, %18, %cst_14 [1] : vector<8x32xf32> to vector<8xf32>
    %20 = vector.shape_cast %19 : vector<8xf32> to vector<8x1xf32>
    %c0_15 = arith.constant 0 : index
    %21 = memref.load %arg7[%c0_15] : memref<1xf32, #tpu.memory_space<smem>>
    %22 = vector.broadcast %21 : f32 to vector<8x1xf32>
    %23 = arith.addf %20, %22 : vector<8x1xf32>
    %c0_16 = arith.constant 0 : index
    %c0_17 = arith.constant 0 : index
    %24 = vector.load %arg8[%c0_16, %c0_17] : memref<8x1xf32, #tpu.memory_space<vmem>>, vector<8x1xf32>
    tpu.vector_store %arg8[%c0_16, %c0_17], %23 {strides = array<i32>} : memref<8x1xf32, #tpu.memory_space<vmem>>, vector<8x1xf32>,
    return
  }
  func.func @transform_0(%arg0: i32) -> (i32, i32) {
    %c0_i32 = arith.constant 0 : i32
    %c0_i32_0 = arith.constant 0 : i32
    return %arg0, %c0_i32 : i32, i32
  }
  func.func @transform_1(%arg0: i32) -> (i32, i32) {
    %c0_i32 = arith.constant 0 : i32
    %c0_i32_0 = arith.constant 0 : i32
    %c0_i32_1 = arith.constant 0 : i32
    return %c0_i32, %c0_i32_0 : i32, i32
  }
  func.func @transform_2(%arg0: i32) -> (i32, i32) {
    %c0_i32 = arith.constant 0 : i32
    %c0_i32_0 = arith.constant 0 : i32
    %c0_i32_1 = arith.constant 0 : i32
    return %c0_i32, %c0_i32_0 : i32, i32
  }
  func.func @transform_3(%arg0: i32) -> (i32, i32) {
    %c0_i32 = arith.constant 0 : i32
    %c0_i32_0 = arith.constant 0 : i32
    %c0_i32_1 = arith.constant 0 : i32
    return %c0_i32, %c0_i32_0 : i32, i32
  }
  func.func @transform_4(%arg0: i32) -> (i32, i32) {
    %c0_i32 = arith.constant 0 : i32
    %c0_i32_0 = arith.constant 0 : i32
    %c0_i32_1 = arith.constant 0 : i32
    return %c0_i32, %c0_i32_0 : i32, i32
  }
  func.func @transform_5(%arg0: i32) -> (i32, i32) {
    %c0_i32 = arith.constant 0 : i32
    %c0_i32_0 = arith.constant 0 : i32
    %c0_i32_1 = arith.constant 0 : i32
    return %c0_i32, %c0_i32_0 : i32, i32
  }
  func.func @transform_6(%arg0: i32) -> i32 {
    %c0_i32 = arith.constant 0 : i32
    %c0_i32_0 = arith.constant 0 : i32
    return %c0_i32 : i32
  }
  func.func @transform_7(%arg0: i32) -> (i32, i32) {
    %c0_i32 = arith.constant 0 : i32
    %c0_i32_0 = arith.constant 0 : i32
    return %arg0, %c0_i32 : i32, i32
  }
}

</mosaic_0001>

<llo_original>
// kernel: tpu_custom_call.1
$region0: #{tpu_custom_call.1}
  #allocation0 [shape = 'u32[]', space=smem, size = 0x4, offset = 0x4, fixed_abs, tag = 'smem constant byte address 0x4 - core index']
  #allocation1 [shape = 'u32[144,128]{1,0:T(1,128)}', space=vmem, size = 0x12000, scoped, tag = 'internal scratch']
  #allocation2 [shape = 'f32[1]{0:T(128)S(6)}', space=smem, size = 0x200, scoped, tag = 'scoped memory for tpu_custom_call.1']
  %s0 = inlined_call_operand.hbm [shape: bf16[8,32], index: 0, kind: input, shape index: {}]
  %s1 = inlined_call_operand.hbm [shape: bf16[32,32], index: 1, kind: input, shape index: {}]
  %s2 = inlined_call_operand.vmem [shape: f32[1,32], index: 2, kind: input, shape index: {}]
  %s3 = inlined_call_operand.hbm [shape: bf16[32,32], index: 3, kind: input, shape index: {}]
  %s4 = inlined_call_operand.vmem [shape: f32[1,32], index: 4, kind: input, shape index: {}]
  %s5 = inlined_call_operand.vmem [shape: f32[1,32], index: 5, kind: input, shape index: {}]
  %s6 = inlined_call_operand.<no memory space> [shape: f32[1], index: 6, kind: input, shape index: {}]
  %s7 = inlined_call_operand.vmem [shape: f32[8,1], index: 7, kind: output, shape index: {}]
  %s8 = sld [smem:[#allocation0]]
  $region50: #{tpu_custom_call.1} parent=0
    _
  %s10 = ssub.s32 1, %s8
  %s11 = scalar_select 0, %s10, %s8
  %12 = sst [smem:[#allocation2]] %s6
  $region1: #{tpu_custom_call.1} parent=0
    #allocation3 [shape = 'u8[2048]{0}', space=vmem, size = 0x800, scoped, tag = 'input window, operand 0, single buffered']
    #allocation4 [shape = 's32[1]{0}', space=sflag, size = 0x4, scoped, tag = 'scoped memory for tpu_custom_call.1']
    #allocation5 [shape = 'u8[8192]{0}', space=vmem, size = 0x2000, scoped, tag = 'input window, operand 1, single buffered']
    #allocation6 [shape = 's32[1]{0}', space=sflag, size = 0x4, scoped, tag = 'scoped memory for tpu_custom_call.1']
    #allocation7 [shape = 'u8[8192]{0}', space=vmem, size = 0x2000, scoped, tag = 'input window, operand 3, single buffered']
    %13 = vsyncpa [#allocation4], 0
    %14 = vsyncpa [#allocation6], 0
    // Predicated region
    $region2: #{tpu_custom_call.1} parent=1 // pred_check
      _
    $region3: #{tpu_custom_call.1} parent=1 // pred_check_branch
      %16 = sbr.rel (0) target = $region5
    $region4: #{tpu_custom_call.1} parent=1 // pred_region
      %s18 = ssub.s32 64, 64
      %19 = vsyncadd [#allocation4], %s18
      %s21 = sshll.u32 [#allocation3], 4
      %s22 = int_to_ptr.vmem [resolvable:$true] %s21
      %24 = dma.hbm_to_vmem [thread:$0]  %s0, 64, %s22, [#allocation4]
    $region5: #{tpu_custom_call.1} parent=1 // pred_fallthru
      _
    // Predicated region
    $region6: #{tpu_custom_call.1} parent=1 // pred_check
      _
    $region7: #{tpu_custom_call.1} parent=1 // pred_check_branch
      %26 = sbr.rel (0) target = $region9
    $region8: #{tpu_custom_call.1} parent=1 // pred_region
      %s28 = ssub.s32 256, 256
      %29 = vsyncadd [#allocation6], %s28
      %s30 = sshll.u32 [#allocation5], 4
      %s31 = int_to_ptr.vmem [resolvable:$true] %s30
      %36 = dma.hbm_to_vmem [thread:$0]  %s1, 256, %s31, [#allocation6], 64, 64, 4
    $region9: #{tpu_custom_call.1} parent=1 // pred_fallthru
      _
    // Predicated region
    $region10: #{tpu_custom_call.1} parent=1 // pred_check
      _
    $region11: #{tpu_custom_call.1} parent=1 // pred_check_branch
      %38 = sbr.rel (0) target = $region13
    $region12: #{tpu_custom_call.1} parent=1 // pred_region
      _
    $region13: #{tpu_custom_call.1} parent=1 // pred_fallthru
      _
    // Predicated region
    $region14: #{tpu_custom_call.1} parent=1 // pred_check
      _
    $region15: #{tpu_custom_call.1} parent=1 // pred_check_branch
      %40 = sbr.rel (0) target = $region17
    $region16: #{tpu_custom_call.1} parent=1 // pred_region
      %s42 = ssub.s32 256, 256
      %43 = vsyncadd [#allocation6], %s42
      %s44 = sshll.u32 [#allocation7], 4
      %s45 = int_to_ptr.vmem [resolvable:$true] %s44
      %50 = dma.hbm_to_vmem [thread:$0]  %s3, 256, %s45, [#allocation6], 64, 64, 4
    $region17: #{tpu_custom_call.1} parent=1 // pred_fallthru
      _
    // Predicated region
    $region18: #{tpu_custom_call.1} parent=1 // pred_check
      _
    $region19: #{tpu_custom_call.1} parent=1 // pred_check_branch
      %52 = sbr.rel (0) target = $region21
    $region20: #{tpu_custom_call.1} parent=1 // pred_region
      _
    $region21: #{tpu_custom_call.1} parent=1 // pred_fallthru
      _
    // Predicated region
    $region22: #{tpu_custom_call.1} parent=1 // pred_check
      _
    $region23: #{tpu_custom_call.1} parent=1 // pred_check_branch
      %54 = sbr.rel (0) target = $region25
    $region24: #{tpu_custom_call.1} parent=1 // pred_region
      _
    $region25: #{tpu_custom_call.1} parent=1 // pred_fallthru
      _
    // Predicated region
    $region26: #{tpu_custom_call.1} parent=1 // pred_check
      _
    $region27: #{tpu_custom_call.1} parent=1 // pred_check_branch
      %56 = sbr.rel (0) target = $region29
    $region28: #{tpu_custom_call.1} parent=1 // pred_region
      _
    $region29: #{tpu_custom_call.1} parent=1 // pred_fallthru
      _
    // Predicated region
    $region30: #{tpu_custom_call.1} parent=1 // pred_check
      _
    $region31: #{tpu_custom_call.1} parent=1 // pred_check_branch
      %58 = sbr.rel (0) target = $region33
    $region32: #{tpu_custom_call.1} parent=1 // pred_region
      %59 = dma.done [#allocation4], 64
    $region33: #{tpu_custom_call.1} parent=1 // pred_fallthru
      _
    // Predicated region
    $region34: #{tpu_custom_call.1} parent=1 // pred_check
      _
    $region35: #{tpu_custom_call.1} parent=1 // pred_check_branch
      %61 = sbr.rel (0) target = $region37
    $region36: #{tpu_custom_call.1} parent=1 // pred_region
      %62 = dma.done [#allocation6], 256
    $region37: #{tpu_custom_call.1} parent=1 // pred_fallthru
      _
    // Predicated region
    $region38: #{tpu_custom_call.1} parent=1 // pred_check
      _
    $region39: #{tpu_custom_call.1} parent=1 // pred_check_branch
      %64 = sbr.rel (0) target = $region41
    $region40: #{tpu_custom_call.1} parent=1 // pred_region
      %65 = dma.done [#allocation6], 256
    $region41: #{tpu_custom_call.1} parent=1 // pred_fallthru
      _
    %v67 = vld [vmem:[#allocation3] sm:$0xf]
    %v68 = vld [vmem:[#allocation5] sm:$0xf]
    %v69 = vld [vmem:[#allocation5 + $0x4] sm:$0xf]
    %v70 = vld [vmem:[#allocation5 + $0x8] sm:$0xf]
    %v71 = vld [vmem:[#allocation5 + $0xc] sm:$0xf]
    %v72 = vld [vmem:[%s2] sm:$0x1]
    %v74 = vlaneseq
    %v75 = vshrl.u32 %v74, 7
    %v76 = vsub.s32 0, %v75
    %v77 = vrot.slane %v72, %v76
    %v83 = vunpack.c.l.b16 %v68
    %v84 = vunpack.c.l.b16 %v69
    %v85 = vunpack.c.l.b16 %v70
    %v86 = vunpack.c.l.b16 %v71
    %v87 = vpack.c.b16 %v84, %v83
    %v88 = vpack.c.b16 %v86, %v85
    %vm91 = vcmask 261120
    %v93 = vsel %vm91, %v67, 0
    %95 = vmatprep.subr.bf16.mxu0 0
    %96 = vmatpush1.bf16.msra.mxu0 0
    %97 = vmatprep.subr.bf16.mxu0 0
    %98 = vmatpush1.bf16.msra.mxu0 0
    %99 = vmatprep.subr.bf16.mxu0 0
    %100 = vmatpush1.bf16.msra.mxu0 0
    %101 = vmatprep.subr.bf16.mxu0 0
    %102 = vmatpush1.bf16.msra.mxu0 0
    %103 = vmatprep.subr.bf16.mxu0 0
    %104 = vmatpush1.bf16.msra.mxu0 0
    %105 = vmatprep.subr.bf16.mxu0 0
    %106 = vmatpush1.bf16.msra.mxu0 0
    %107 = vmatprep.subr.bf16.mxu0 0
    %108 = vmatpush1.bf16.msra.mxu0 %v88
    %109 = vmatprep.subr.bf16.mxu0 0
    %110 = vmatpush1.bf16.msra.mxu0 %v87
    %111 = vmatprep.subr.bf16.mxu0 0
    %112 = vmatpush2.bf16.msra.mxu0 0
    %113 = vmatprep.subr.bf16.mxu0 0
    %114 = vmatpush2.bf16.msra.mxu0 0
    %115 = vmatprep.subr.bf16.mxu0 0
    %116 = vmatpush2.bf16.msra.mxu0 0
    %117 = vmatprep.subr.bf16.mxu0 0
    %118 = vmatpush2.bf16.msra.mxu0 0
    %119 = vmatprep.subr.bf16.mxu0 0
    %120 = vmatpush2.bf16.msra.mxu0 0
    %121 = vmatprep.subr.bf16.mxu0 0
    %122 = vmatpush2.bf16.msra.mxu0 0
    %123 = vmatprep.subr.bf16.mxu0 0
    %124 = vmatpush2.bf16.msra.mxu0 0
    %125 = vmatprep.subr.bf16.mxu0 0
    %126 = vmatpush2.bf16.msra.mxu0 0
    %127 = vmatprep.mubr.bf16.mxu0 0
    %128 = vmatmul.mubr.bf16.gmra.mxu0 %v93
    %v129 = vpop.f32.mrf.mxu0
    %v130 = vadd.f32 %v77, %v129
    %v131 = vpop.f32.mrf.mxu0
    %v132 = vpop.f32.mrf.mxu0
    %v133 = vpop.f32.mrf.mxu0
    %134 = vdwg.mxu0
    %v135 = vmax.f32 %v130, 0.0
    %v136 = vpack.c.bf16 %v135, %v135
    %v137 = vld [vmem:[#allocation7] sm:$0xf]
    %v138 = vld [vmem:[#allocation7 + $0x4] sm:$0xf]
    %v139 = vld [vmem:[#allocation7 + $0x8] sm:$0xf]
    %v140 = vld [vmem:[#allocation7 + $0xc] sm:$0xf]
    %v141 = vld [vmem:[%s4] sm:$0x1]
    %v143 = vlaneseq
    %v144 = vshrl.u32 %v143, 7
    %v145 = vsub.s32 0, %v144
    %v146 = vrot.slane %v141, %v145
    %v152 = vunpack.c.l.b16 %v137
    %v153 = vunpack.c.l.b16 %v138
    %v154 = vunpack.c.l.b16 %v139
    %v155 = vunpack.c.l.b16 %v140
    %v156 = vpack.c.b16 %v153, %v152
    %v157 = vpack.c.b16 %v155, %v154
    %v161 = vsel %vm91, %v136, 0
    %163 = vmatprep.subr.bf16.mxu0 0
    %164 = vmatpush1.bf16.msra.mxu0 0
    %165 = vmatprep.subr.bf16.mxu0 0
    %166 = vmatpush1.bf16.msra.mxu0 0
    %167 = vmatprep.subr.bf16.mxu0 0
    %168 = vmatpush1.bf16.msra.mxu0 0
    %169 = vmatprep.subr.bf16.mxu0 0
    %170 = vmatpush1.bf16.msra.mxu0 0
    %171 = vmatprep.subr.bf16.mxu0 0
    %172 = vmatpush1.bf16.msra.mxu0 0
    %173 = vmatprep.subr.bf16.mxu0 0
    %174 = vmatpush1.bf16.msra.mxu0 0
    %175 = vmatprep.subr.bf16.mxu0 0
    %176 = vmatpush1.bf16.msra.mxu0 %v157
    %177 = vmatprep.subr.bf16.mxu0 0
    %178 = vmatpush1.bf16.msra.mxu0 %v156
    %179 = vmatprep.subr.bf16.mxu0 0
    %180 = vmatpush2.bf16.msra.mxu0 0
    %181 = vmatprep.subr.bf16.mxu0 0
    %182 = vmatpush2.bf16.msra.mxu0 0
    %183 = vmatprep.subr.bf16.mxu0 0
    %184 = vmatpush2.bf16.msra.mxu0 0
    %185 = vmatprep.subr.bf16.mxu0 0
    %186 = vmatpush2.bf16.msra.mxu0 0
    %187 = vmatprep.subr.bf16.mxu0 0
    %188 = vmatpush2.bf16.msra.mxu0 0
    %189 = vmatprep.subr.bf16.mxu0 0
    %190 = vmatpush2.bf16.msra.mxu0 0
    %191 = vmatprep.subr.bf16.mxu0 0
    %192 = vmatpush2.bf16.msra.mxu0 0
    %193 = vmatprep.subr.bf16.mxu0 0
    %194 = vmatpush2.bf16.msra.mxu0 0
    %195 = vmatprep.mubr.bf16.mxu0 0
    %196 = vmatmul.mubr.bf16.gmra.mxu0 %v161
    %v197 = vpop.f32.mrf.mxu0
    %v198 = vadd.f32 %v146, %v197
    %v199 = vpop.f32.mrf.mxu0
    %v200 = vpop.f32.mrf.mxu0
    %v201 = vpop.f32.mrf.mxu0
    %202 = vdwg.mxu0
    %v203 = vmax.f32 %v198, 0.0
    %v204 = vld [vmem:[%s5] sm:$0x1]
    %v206 = vlaneseq
    %v207 = vshrl.u32 %v206, 7
    %v208 = vsub.s32 0, %v207
    %v209 = vrot.slane %v204, %v208
    %v211 = vmul.f32 %v203, %v209
    %v212 = vsel %vm91, %v211, 0.0
    %213 = vadd.xlane.f32.xlu0 %v212
    %v214 = vpop.xlane.xlu0 %213
    %s215 = sld [smem:[#allocation2]]
    %v216 = vstv %s215
    %v217 = vadd.f32 %v214, %v216
    %vm218 = vcmask 7168
    %219 = vst.msk [vmem:[%s7] sm:$0xff] %vm218, %v217
    // Predicated region
    $region42: #{tpu_custom_call.1} parent=1 // pred_check
      _
    $region43: #{tpu_custom_call.1} parent=1 // pred_check_branch
      %221 = sbr.rel (0) target = $region45
    $region44: #{tpu_custom_call.1} parent=1 // pred_region
      _
    $region45: #{tpu_custom_call.1} parent=1 // pred_fallthru
      _
    // Predicated region
    $region46: #{tpu_custom_call.1} parent=1 // pred_check
      _
    $region47: #{tpu_custom_call.1} parent=1 // pred_check_branch
      %223 = sbr.rel (0) target = $region49
    $region48: #{tpu_custom_call.1} parent=1 // pred_region
      _
    $region49: #{tpu_custom_call.1} parent=1 // pred_fallthru
      _
    %224 = vsyncpa [#allocation4], 1
    %225 = vsyncpa [#allocation6], 1

</llo_original>
